<compile_context>
chip_gen: v6e
topology: v6e:2x2x1
jax: 0.10.0
libtpu: 0.0.40
codegen_flags: <defaults>
</compile_context>

<pallas_src>
import jax
import jax.numpy as jnp
from jax import lax
from jax.experimental import pallas as pl
from jax.experimental.pallas import tpu as pltpu


def _round_up(x, m):
    return ((x + m - 1) // m) * m


def _num_tensorcores():
    """Best-effort TensorCore count (2 on v7x, 1 on v5e/v6e); defaults to 1."""
    try:
        info = pltpu.get_tpu_info()
        for attr in ("num_cores", "num_tensorcores", "tensorcore_count",
                     "cores_per_chip", "num_tensor_cores"):
            v = getattr(info, attr, None)
            if isinstance(v, int) and v > 0:
                return v
    except Exception:
        pass
    return 1


def _make_confusion_kernel(n_actual, tile_n, c_pad):
    def kernel(y_pred_ref, y_true_ref, out_ref):
        # y_pred_ref: (tile_n, c_pad) logits, native dtype, columns padded with dtype-min
        # y_true_ref: (tile_n, 1) int32 labels (-1 marks padded rows)
        # out_ref:    (3, 8, c_pad) f32 resident accumulator:
        #             [tp ; pred_count ; true_count], un-reduced over 8 sublanes.
        shard = pl.program_id(0)
        step = pl.program_id(1)
        steps = pl.num_programs(1)

        @pl.when(step == 0)
        def _init():
            out_ref[...] = jnp.zeros_like(out_ref)

        y_pred = y_pred_ref[...]
        y_true = y_true_ref[...]

        class_ids = lax.broadcasted_iota(jnp.int32, (tile_n, c_pad), 1)
        row_ids = lax.broadcasted_iota(jnp.int32, (tile_n, 1), 0)
        global_row = (shard * steps + step) * tile_n + row_ids          # (tile_n, 1)

        # argmax over classes, first-occurrence tie-break (== torch.argmax).
        max_val = jnp.max(y_pred, axis=1, keepdims=True)                # (tile_n, 1)
        pred_idx = jnp.min(jnp.where(y_pred == max_val, class_ids, c_pad),
                           axis=1, keepdims=True)                       # (tile_n, 1)
        # Fold row validity into pred_idx in the cheap (tile_n, 1) domain.
        pred_idx = jnp.where(global_row < n_actual, pred_idx, c_pad)

        pred_oh = class_ids == pred_idx        # bool (tile_n, c_pad)
        true_oh = class_ids == y_true          # padded rows carry -1 -> never match

        tp_f = (pred_oh & true_oh).astype(jnp.float32)
        pred_f = pred_oh.astype(jnp.float32)
        true_f = true_oh.astype(jnp.float32)

        # Full-vreg partial sums: collapse the batch onto 8 sublanes with pure
        # vreg adds; the final 8-way sublane reduce happens in the JAX glue.
        r = tile_n // 8
        out_ref[0, :, :] += tp_f.reshape(r, 8, c_pad).sum(axis=0)
        out_ref[1, :, :] += pred_f.reshape(r, 8, c_pad).sum(axis=0)
        out_ref[2, :, :] += true_f.reshape(r, 8, c_pad).sum(axis=0)

    return kernel


def confusion_counts(y_pred, y_true, *, tile_n=1024, num_shards=None):
    """Per-class tp / predicted-count / true-count sums over the batch.

    Returns three (C,) float32 vectors: tp, pred_count, true_count.
    Derive fp = pred_count - tp, fn = true_count - tp, tn = N - tp - fp - fn.
    """
    n, c = y_pred.shape
    itemsize = jnp.dtype(y_pred.dtype).itemsize
    c_pad = _round_up(max(c, 1), 128)

    # Sublane packing of the logit dtype: f32 -> 8, bf16 -> 16, int8/fp8 -> 32.
    sub = max(8, 32 // itemsize)

    # Honest VMEM budget: double-buffered logit tile + double-buffered label
    # tile (lane-padded to (tile_n, 128) int32 in VMEM) + ~4 live f32
    # (tile_n, c_pad) intermediates.  Target 20 MiB under a 32 MiB scoped
    # limit (fits v5e/v6e 128 MiB and v7x 64 MiB physical VMEM).
    label_row_vmem = 128 * 4
    per_row_bytes = 2 * (c_pad * itemsize + label_row_vmem) + 4 * c_pad * 4
    max_rows = max(sub, (20 * 1024 * 1024) // per_row_bytes)

    tile_n = int(min(tile_n, max_rows, _round_up(n, sub)))
    tile_n = max(sub, (tile_n // sub) * sub)

    total_tiles = pl.cdiv(n, tile_n)
    if num_shards is None:
        num_shards = _num_tensorcores()
    # TODO(synk): on v7x verify via trace that "parallel" shards across both
    # TensorCores; switch to pltpu.CORE_PARALLEL / pl.core_map if it doesn't.
    shards = int(max(1, min(num_shards, total_tiles)))
    steps = pl.cdiv(total_tiles, shards)
    n_pad = shards * steps * tile_n

    if jnp.issubdtype(y_pred.dtype, jnp.floating):
        pad_val = float(jnp.finfo(y_pred.dtype).min)
    else:
        pad_val = int(jnp.iinfo(y_pred.dtype).min)
    y_pred_p = jnp.pad(y_pred, ((0, n_pad - n), (0, c_pad - c)),
                       constant_values=pad_val)
    y_true_p = jnp.pad(y_true.astype(jnp.int32).reshape(n, 1),
                       ((0, n_pad - n), (0, 0)), constant_values=-1)

    kernel = _make_confusion_kernel(n, tile_n, c_pad)

    cost = pl.CostEstimate(
        flops=int(6 * n_pad * c_pad),
        transcendentals=0,
        bytes_accessed=int(n_pad * c_pad * itemsize + n_pad * 4
                           + shards * 3 * 8 * c_pad * 4),
    )

    out = pl.pallas_call(
        kernel,
        out_shape=jax.ShapeDtypeStruct((shards, 3, 8, c_pad), jnp.float32),
        grid_spec=pltpu.PrefetchScalarGridSpec(
            num_scalar_prefetch=0,
            grid=(shards, steps),
            in_specs=[
                pl.BlockSpec((tile_n, c_pad), lambda s, i: (s * steps + i, 0)),
                pl.BlockSpec((tile_n, 1), lambda s, i: (s * steps + i, 0)),
            ],
            out_specs=pl.BlockSpec((None, 3, 8, c_pad),
                                   lambda s, i: (s, 0, 0, 0)),
        ),
        compiler_params=pltpu.CompilerParams(
            dimension_semantics=("parallel", "arbitrary"),
            vmem_limit_bytes=32 * 1024 * 1024),
        cost_estimate=cost,
    )(y_pred_p, y_true_p)

    counts = out.sum(axis=(0, 2))            # combine shards + 8 sublane partials
    tp = counts[0, :c]
    pred_count = counts[1, :c]
    true_count = counts[2, :c]
    return tp, pred_count, true_count


def f1_score_forward(y_pred, y_true, num_classes, epsilon=1e-07):
    """Mirrors F1_score.forward with zero initial counters.

    Returns (accuracy*100, precision.mean()*100, recall.mean()*100, f1*100).
    """
    assert y_pred.ndim == 2
    assert y_true.ndim == 1
    n = y_pred.shape[0]

    tp, pred_count, true_count = confusion_counts(y_pred, y_true)
    fp = pred_count - tp
    fn = true_count - tp
    tn = jnp.float32(n) - tp - fp - fn

    precision = tp / (tp + fp + epsilon)
    recall = tp / (tp + fn + epsilon)
    accuracy = tp.sum() / (tp.sum() + tn.sum() + fp.sum() + fn.sum())
    accuracy = accuracy * num_classes
    f1 = 2.0 * (precision * recall) / (precision + recall + epsilon)
    f1 = f1.mean()

    return (accuracy * 100.0,
            precision.mean() * 100.0,
            recall.mean() * 100.0,
            f1 * 100.0)


if __name__ == "__main__":
    num_classes = 10

    def _reference_counts(y_pred, y_true, c):
        true_oh = jax.nn.one_hot(y_true, c)
        pred_oh = jax.nn.one_hot(jnp.argmax(y_pred, axis=1), c)
        tp = (true_oh * pred_oh).sum(0)
        fp = ((1 - true_oh) * pred_oh).sum(0)
        fn = (true_oh * (1 - pred_oh)).sum(0)
        tn = ((1 - true_oh) * (1 - pred_oh)).sum(0)
        return tp, fp, fn, tn

    key = jax.random.PRNGKey(0)
    k1, k2, k3, k4, k5, k6 = jax.random.split(key, 6)

    # Test 1: small batch (single tile, single shard) + full forward.
    y_pred = jax.random.normal(k1, (16, num_classes), dtype=jnp.float32)
    y_true = jax.random.randint(k2, (16,), 0, num_classes, dtype=jnp.int32)

    acc, prec, rec, f1 = f1_score_forward(y_pred, y_true, num_classes)
    jax.block_until_ready((acc, prec, rec, f1))

    tp, pc, tc = confusion_counts(y_pred, y_true)
    rtp, rfp, rfn, rtn = _reference_counts(y_pred, y_true, num_classes)
    assert jnp.allclose(tp, rtp)
    assert jnp.allclose(pc - tp, rfp)
    assert jnp.allclose(tc - tp, rfn)
    assert jnp.allclose(16.0 - tp - (pc - tp) - (tc - tp), rtn)

    # Test 2: multi-tile, 2-shard path with row padding / masking.
    y_pred2 = jax.random.normal(k3, (300, num_classes), dtype=jnp.float32)
    y_true2 = jax.random.randint(k4, (300,), 0, num_classes, dtype=jnp.int32)
    tp2, pc2, tc2 = confusion_counts(y_pred2, y_true2, tile_n=64, num_shards=2)
    rtp2, rfp2, rfn2, rtn2 = _reference_counts(y_pred2, y_true2, num_classes)
    assert jnp.allclose(tp2, rtp2)
    assert jnp.allclose(pc2 - tp2, rfp2)
    assert jnp.allclose(tc2 - tp2, rfn2)
    assert jnp.allclose(300.0 - tp2 - (pc2 - tp2) - (tc2 - tp2), rtn2)

    # Test 3: bf16 logits (exercises sublane-packing-aware tile rounding).
    y_pred3 = jax.random.normal(k5, (40, num_classes), dtype=jnp.bfloat16)
    y_true3 = jax.random.randint(k6, (40,), 0, num_classes, dtype=jnp.int32)
    tp3, pc3, tc3 = confusion_counts(y_pred3, y_true3)
    rtp3, rfp3, rfn3, _ = _reference_counts(y_pred3, y_true3, num_classes)
    assert jnp.allclose(tp3, rtp3)
    assert jnp.allclose(pc3 - tp3, rfp3)
    assert jnp.allclose(tc3 - tp3, rfn3)

    print("KERNEL_OK")
</pallas_src>

<mosaic_0001>
module attributes {stable_mosaic.version = 11 : i64} {
  func.func @kernel(%arg0: i32, %arg1: i32, %arg2: memref<16x128xf32, #tpu.memory_space<vmem>>, %arg3: memref<16x1xi32, #tpu.memory_space<vmem>>, %arg4: memref<1x3x8x128xf32, #tpu.memory_space<vmem>>) attributes {dimension_semantics = [#tpu.dimension_semantics<parallel>, #tpu.dimension_semantics<arbitrary>], iteration_bounds = array<i64: 1, 1>, scalar_prefetch = 0 : i64, scratch_operands = 0 : i64, tpu.core_type = #tpu.core_type<tc>, window_params = [{transform_indices = @transform_0, window_bounds = array<i64: 16, 128>}, {transform_indices = @transform_1, window_bounds = array<i64: 16, 1>}, {transform_indices = @transform_2, window_bounds = array<i64: 1, 3, 8, 128>}]} {
    %c0_i32 = arith.constant 0 : i32
    %0 = arith.cmpi eq, %arg1, %c0_i32 : i32
    %1 = arith.extui %0 : i1 to i32
    %c0_i32_0 = arith.constant 0 : i32
    %2 = arith.cmpi ne, %1, %c0_i32_0 : i32
    scf.if %2 {
      %cst_32 = arith.constant 0.000000e+00 : f32
      %59 = vector.broadcast %cst_32 : f32 to vector<3x8x128xf32>
      %c0_33 = arith.constant 0 : index
      %c0_34 = arith.constant 0 : index
      %c0_35 = arith.constant 0 : index
      %c0_36 = arith.constant 0 : index
      %60 = vector.load %arg4[%c0_33, %c0_34, %c0_35, %c0_36] : memref<1x3x8x128xf32, #tpu.memory_space<vmem>>, vector<1x3x8x128xf32>
      %61 = vector.shape_cast %60 : vector<1x3x8x128xf32> to vector<3x8x128xf32>
      %62 = vector.shape_cast %59 : vector<3x8x128xf32> to vector<1x3x8x128xf32>
      tpu.vector_store %arg4[%c0_33, %c0_34, %c0_35, %c0_36], %62 {strides = array<i32>} : memref<1x3x8x128xf32, #tpu.memory_space<vmem>>, vector<1x3x8x128xf32>,
    } else {
    }
    %c0 = arith.constant 0 : index
    %c0_1 = arith.constant 0 : index
    %3 = vector.load %arg2[%c0, %c0_1] : memref<16x128xf32, #tpu.memory_space<vmem>>, vector<16x128xf32>
    %c0_2 = arith.constant 0 : index
    %c0_3 = arith.constant 0 : index
    %4 = vector.load %arg3[%c0_2, %c0_3] : memref<16x1xi32, #tpu.memory_space<vmem>>, vector<16x1xi32>
    %5 = tpu.iota {dimensions = array<i32: 1>} : vector<16x128xi32>
    %6 = tpu.iota {dimensions = array<i32: 0>} : vector<16x1xi32>
    %c1_i32 = arith.constant 1 : i32
    %7 = arith.muli %arg0, %c1_i32 : i32
    %8 = arith.addi %7, %arg1 : i32
    %c16_i32 = arith.constant 16 : i32
    %9 = arith.muli %8, %c16_i32 : i32
    %10 = vector.broadcast %9 : i32 to vector<16x1xi32>
    %11 = arith.addi %10, %6 : vector<16x1xi32>
    %cst = arith.constant dense<0xFF800000> : vector<16xf32>
    %12 = vector.multi_reduction <maximumf>, %3, %cst [1] : vector<16x128xf32> to vector<16xf32>
    %13 = vector.shape_cast %12 : vector<16xf32> to vector<16x1xf32>
    %14 = vector.broadcast %13 : vector<16x1xf32> to vector<16x128xf32>
    %15 = arith.cmpf oeq, %3, %14 : vector<16x128xf32>
    %c128_i32 = arith.constant 128 : i32
    %16 = vector.broadcast %c128_i32 : i32 to vector<16x128xi32>
    %17 = arith.select %15, %5, %16 : vector<16x128xi1>, vector<16x128xi32>
    %cst_4 = arith.constant dense<2147483647> : vector<16xi32>
    %18 = vector.multi_reduction <minsi>, %17, %cst_4 [1] : vector<16x128xi32> to vector<16xi32>
    %19 = vector.shape_cast %18 : vector<16xi32> to vector<16x1xi32>
    %c16_i32_5 = arith.constant 16 : i32
    %20 = vector.broadcast %c16_i32_5 : i32 to vector<16x1xi32>
    %21 = arith.cmpi slt, %11, %20 : vector<16x1xi32>
    %c128_i32_6 = arith.constant 128 : i32
    %22 = vector.broadcast %c128_i32_6 : i32 to vector<16x1xi32>
    %23 = arith.select %21, %19, %22 : vector<16x1xi1>, vector<16x1xi32>
    %24 = vector.broadcast %23 : vector<16x1xi32> to vector<16x128xi32>
    %25 = arith.cmpi eq, %5, %24 : vector<16x128xi32>
    %26 = vector.broadcast %4 : vector<16x1xi32> to vector<16x128xi32>
    %27 = arith.cmpi eq, %5, %26 : vector<16x128xi32>
    %28 = arith.andi %25, %27 : vector<16x128xi1>
    %29 = arith.extui %28 : vector<16x128xi1> to vector<16x128xi32>
    %30 = arith.sitofp %29 : vector<16x128xi32> to vector<16x128xf32>
    %31 = arith.extui %25 : vector<16x128xi1> to vector<16x128xi32>
    %32 = arith.sitofp %31 : vector<16x128xi32> to vector<16x128xf32>
    %33 = arith.extui %27 : vector<16x128xi1> to vector<16x128xi32>
    %34 = arith.sitofp %33 : vector<16x128xi32> to vector<16x128xf32>
    %c0_7 = arith.constant 0 : index
    %c0_8 = arith.constant 0 : index
    %c0_9 = arith.constant 0 : index
    %c0_10 = arith.constant 0 : index
    %35 = vector.load %arg4[%c0_7, %c0_8, %c0_9, %c0_10] : memref<1x3x8x128xf32, #tpu.memory_space<vmem>>, vector<1x1x8x128xf32>
    %36 = vector.shape_cast %35 : vector<1x1x8x128xf32> to vector<8x128xf32>
    %37 = vector.shape_cast %30 : vector<16x128xf32> to vector<2x8x128xf32>
    %cst_11 = arith.constant dense<0.000000e+00> : vector<8x128xf32>
    %38 = vector.multi_reduction <add>, %37, %cst_11 [0] : vector<2x8x128xf32> to vector<8x128xf32>
    %39 = arith.addf %36, %38 : vector<8x128xf32>
    %c0_12 = arith.constant 0 : index
    %c0_13 = arith.constant 0 : index
    %c0_14 = arith.constant 0 : index
    %c0_15 = arith.constant 0 : index
    %40 = vector.load %arg4[%c0_12, %c0_13, %c0_14, %c0_15] : memref<1x3x8x128xf32, #tpu.memory_space<vmem>>, vector<1x1x8x128xf32>
    %41 = vector.shape_cast %40 : vector<1x1x8x128xf32> to vector<8x128xf32>
    %42 = vector.shape_cast %39 : vector<8x128xf32> to vector<1x1x8x128xf32>
    tpu.vector_store %arg4[%c0_12, %c0_13, %c0_14, %c0_15], %42 {strides = array<i32>} : memref<1x3x8x128xf32, #tpu.memory_space<vmem>>, vector<1x1x8x128xf32>,
    %c0_16 = arith.constant 0 : index
    %c1 = arith.constant 1 : index
    %c0_17 = arith.constant 0 : index
    %c0_18 = arith.constant 0 : index
    %43 = vector.load %arg4[%c0_16, %c1, %c0_17, %c0_18] : memref<1x3x8x128xf32, #tpu.memory_space<vmem>>, vector<1x1x8x128xf32>
    %44 = vector.shape_cast %43 : vector<1x1x8x128xf32> to vector<8x128xf32>
    %45 = vector.shape_cast %32 : vector<16x128xf32> to vector<2x8x128xf32>
    %cst_19 = arith.constant dense<0.000000e+00> : vector<8x128xf32>
    %46 = vector.multi_reduction <add>, %45, %cst_19 [0] : vector<2x8x128xf32> to vector<8x128xf32>
    %47 = arith.addf %44, %46 : vector<8x128xf32>
    %c0_20 = arith.constant 0 : index
    %c1_21 = arith.constant 1 : index
    %c0_22 = arith.constant 0 : index
    %c0_23 = arith.constant 0 : index
    %48 = vector.load %arg4[%c0_20, %c1_21, %c0_22, %c0_23] : memref<1x3x8x128xf32, #tpu.memory_space<vmem>>, vector<1x1x8x128xf32>
    %49 = vector.shape_cast %48 : vector<1x1x8x128xf32> to vector<8x128xf32>
    %50 = vector.shape_cast %47 : vector<8x128xf32> to vector<1x1x8x128xf32>
    tpu.vector_store %arg4[%c0_20, %c1_21, %c0_22, %c0_23], %50 {strides = array<i32>} : memref<1x3x8x128xf32, #tpu.memory_space<vmem>>, vector<1x1x8x128xf32>,
    %c0_24 = arith.constant 0 : index
    %c2 = arith.constant 2 : index
    %c0_25 = arith.constant 0 : index
    %c0_26 = arith.constant 0 : index
    %51 = vector.load %arg4[%c0_24, %c2, %c0_25, %c0_26] : memref<1x3x8x128xf32, #tpu.memory_space<vmem>>, vector<1x1x8x128xf32>
    %52 = vector.shape_cast %51 : vector<1x1x8x128xf32> to vector<8x128xf32>
    %53 = vector.shape_cast %34 : vector<16x128xf32> to vector<2x8x128xf32>
    %cst_27 = arith.constant dense<0.000000e+00> : vector<8x128xf32>
    %54 = vector.multi_reduction <add>, %53, %cst_27 [0] : vector<2x8x128xf32> to vector<8x128xf32>
    %55 = arith.addf %52, %54 : vector<8x128xf32>
    %c0_28 = arith.constant 0 : index
    %c2_29 = arith.constant 2 : index
    %c0_30 = arith.constant 0 : index
    %c0_31 = arith.constant 0 : index
    %56 = vector.load %arg4[%c0_28, %c2_29, %c0_30, %c0_31] : memref<1x3x8x128xf32, #tpu.memory_space<vmem>>, vector<1x1x8x128xf32>
    %57 = vector.shape_cast %56 : vector<1x1x8x128xf32> to vector<8x128xf32>
    %58 = vector.shape_cast %55 : vector<8x128xf32> to vector<1x1x8x128xf32>
    tpu.vector_store %arg4[%c0_28, %c2_29, %c0_30, %c0_31], %58 {strides = array<i32>} : memref<1x3x8x128xf32, #tpu.memory_space<vmem>>, vector<1x1x8x128xf32>,
    return
  }
  func.func @transform_0(%arg0: i32, %arg1: i32) -> (i32, i32) {
    %c1_i32 = arith.constant 1 : i32
    %0 = arith.muli %arg0, %c1_i32 : i32
    %1 = arith.addi %0, %arg1 : i32
    %c0_i32 = arith.constant 0 : i32
    %c0_i32_0 = arith.constant 0 : i32
    return %1, %c0_i32 : i32, i32
  }
  func.func @transform_1(%arg0: i32, %arg1: i32) -> (i32, i32) {
    %c1_i32 = arith.constant 1 : i32
    %0 = arith.muli %arg0, %c1_i32 : i32
    %1 = arith.addi %0, %arg1 : i32
    %c0_i32 = arith.constant 0 : i32
    %c0_i32_0 = arith.constant 0 : i32
    return %1, %c0_i32 : i32, i32
  }
  func.func @transform_2(%arg0: i32, %arg1: i32) -> (i32, i32, i32, i32) {
    %c0_i32 = arith.constant 0 : i32
    %c0_i32_0 = arith.constant 0 : i32
    %c0_i32_1 = arith.constant 0 : i32
    %c0_i32_2 = arith.constant 0 : i32
    return %arg0, %c0_i32, %c0_i32_0, %c0_i32_1 : i32, i32, i32, i32
  }
}

</mosaic_0001>

<llo_original>
// kernel: tpu_custom_call.1
$region0: #{tpu_custom_call.1}
  #allocation0 [shape = 'u32[]', space=smem, size = 0x4, offset = 0x4, fixed_abs, tag = 'smem constant byte address 0x4 - core index']
  #allocation1 [shape = 'u32[144,128]{1,0:T(1,128)}', space=vmem, size = 0x12000, scoped, tag = 'internal scratch']
  %s0 = inlined_call_operand.vmem [shape: f32[16,128], index: 0, kind: input, shape index: {}]
  %s1 = inlined_call_operand.vmem [shape: s32[16,1], index: 1, kind: input, shape index: {}]
  %s2 = inlined_call_operand.hbm [shape: f32[1,3,8,128], index: 2, kind: output, shape index: {}]
  %s3 = sld [smem:[#allocation0]]
  $region22: #{tpu_custom_call.1} parent=0
    _
  %s5 = ssub.s32 1, %s3
  %s6 = scalar_select 0, %s5, %s3
  $region1: #{tpu_custom_call.1} parent=0
    #allocation2 [shape = 'u8[12288]{0}', space=vmem, size = 0x3000, scoped, tag = 'output window, operand 0, single buffered']
    #allocation3 [shape = 's32[1]{0}', space=sflag, size = 0x4, scoped, tag = 'scoped memory for tpu_custom_call.1']
    %7 = vsyncpa [#allocation3], 0
    // Predicated region
    $region2: #{tpu_custom_call.1} parent=1 // pred_check
      _
    $region3: #{tpu_custom_call.1} parent=1 // pred_check_branch
      %9 = sbr.rel (0) target = $region5
    $region4: #{tpu_custom_call.1} parent=1 // pred_region
      %s10 = sadd.s32 0, 0
      %s11 = smul.u32 2, %s10
      %p12 = scmp.lt.s32.totalorder %s11, 1
      %s13 = scalar_select %p12, %s11, 1
      %s14 = smul.addr %s13, 8
      %s15 = scalar_lea.vmem %s0, %s14
      %s16 = sadd.s32 0, 0
      %s17 = smul.u32 2, %s16
    $region5: #{tpu_custom_call.1} parent=1 // pred_fallthru
      _
    // Predicated region
    $region6: #{tpu_custom_call.1} parent=1 // pred_check
      _
    $region7: #{tpu_custom_call.1} parent=1 // pred_check_branch
      %19 = sbr.rel (0) target = $region9
    $region8: #{tpu_custom_call.1} parent=1 // pred_region
      %s20 = sadd.s32 0, 0
      %s21 = smul.u32 2, %s20
      %p22 = scmp.lt.s32.totalorder %s21, 1
      %s23 = scalar_select %p22, %s21, 1
      %s24 = smul.addr %s23, 8
      %s25 = scalar_lea.vmem %s1, %s24
      %s26 = sadd.s32 0, 0
      %s27 = smul.u32 2, %s26
    $region9: #{tpu_custom_call.1} parent=1 // pred_fallthru
      _
    %s28 = sadd.s32 0, 0
    %s29 = smul.u32 2, %s28
    %p30 = scmp.lt.s32.totalorder %s29, 1
    %s31 = scalar_select %p30, %s29, 1
    %s32 = smul.addr %s31, 8
    %s33 = scalar_lea.vmem %s0, %s32
    %s34 = sadd.s32 0, 0
    %s35 = smul.u32 2, %s34
    %p36 = scmp.lt.s32.totalorder %s35, 1
    %s37 = scalar_select %p36, %s35, 1
    %s38 = smul.addr %s37, 8
    %s39 = scalar_lea.vmem %s1, %s38
    %s40 = sadd.s32 0, 0
    %s41 = smul.u32 2, %s40
    %p42 = scmp.lt.s32.totalorder %s41, 1
    %s43 = scalar_select %p42, %s41, 1
    %s44 = smul.addr %s43, 8
    %s45 = scalar_lea.vmem %s0, %s44
    %s46 = sadd.s32 0, 0
    %s47 = smul.u32 2, %s46
    %s48 = sadd.s32 0, 0
    %s49 = smul.u32 2, %s48
    %p50 = scmp.lt.s32.totalorder %s49, 1
    %s51 = scalar_select %p50, %s49, 1
    %s52 = smul.addr %s51, 8
    %s53 = scalar_lea.vmem %s1, %s52
    %s54 = sadd.s32 0, 0
    %s55 = smul.u32 2, %s54
    %p56 = scmp.eq.s32.totalorder 0, 0
    // Predicated region
    $region10: #{tpu_custom_call.1} parent=1 // pred_check
      %p57 = pneg %p56
    $region11: #{tpu_custom_call.1} parent=1 // pred_check_branch
      %59 = sbr.rel (%p57) target = $region13
    $region12: #{tpu_custom_call.1} parent=1 // pred_region
      %60 = vst [vmem:[#allocation2] sm:$0xff] 0.0
      %61 = vst [vmem:[#allocation2 + $0x8] sm:$0xff] 0.0
      %62 = vst [vmem:[#allocation2 + $0x10] sm:$0xff] 0.0
    $region13: #{tpu_custom_call.1} parent=1 // pred_fallthru
      _
    %v63 = vld [vmem:[%s45] sm:$0xff]
    %v64 = vld [vmem:[%s45 + $0x8] sm:$0xff]
    %v65 = vld [vmem:[%s53] sm:$0xff]
    %v66 = vld [vmem:[%s53 + $0x8] sm:$0xff]
    %v67 = vlaneseq
    %v68 = vand.u32 %v67, 127
    %v69 = vlaneseq
    %v70 = vshrl.u32 %v69, 7
    %v71 = vadd.s32 %v70, 8
    %s72 = sadd.s32 0, 0
    %s73 = smul.u32 %s72, 16
    %v74 = vstv %s73
    %v75 = vadd.s32 %v74, %v70
    %v76 = vadd.s32 %v74, %v71
    %77 = vmax.xlane.f32.xlu0 %v63
    %v78 = vpop.xlane.xlu0 %77
    %79 = vmax.xlane.f32.xlu0 %v64
    %v80 = vpop.xlane.xlu0 %79
    %vm81 = vcmp.eq.f32.partialorder %v63, %v78
    %vm82 = vcmp.eq.f32.partialorder %v64, %v80
    %v83 = vsel %vm81, %v68, 128
    %v84 = vsel %vm82, %v68, 128
    %v85 = vand.u32 %v83, 65535
    %v86 = vshra.s32 %v83, 16
    %v87 = vcvt.s32.f32 %v85
    %v88 = vcvt.s32.f32 %v86
    %89 = vmin.xlane.f32.xlu0 %v88
    %v90 = vpop.xlane.xlu0 %89
    %vm91 = vcmp.eq.f32.partialorder %v88, %v90
    %v92 = vsel %vm91, %v87, inf
    %93 = vmin.xlane.f32.xlu0 %v92
    %v94 = vpop.xlane.xlu0 %93
    %v95 = vcvt.f32.s32 %v94
    %v96 = vcvt.f32.s32 %v90
    %v97 = vshll.u32 %v96, 16
    %v98 = vadd.s32 %v97, %v95
    %v99 = vand.u32 %v84, 65535
    %v100 = vshra.s32 %v84, 16
    %v101 = vcvt.s32.f32 %v99
    %v102 = vcvt.s32.f32 %v100
    %103 = vmin.xlane.f32.xlu0 %v102
    %v104 = vpop.xlane.xlu0 %103
    %vm105 = vcmp.eq.f32.partialorder %v102, %v104
    %v106 = vsel %vm105, %v101, inf
    %107 = vmin.xlane.f32.xlu0 %v106
    %v108 = vpop.xlane.xlu0 %107
    %v109 = vcvt.f32.s32 %v108
    %v110 = vcvt.f32.s32 %v104
    %v111 = vshll.u32 %v110, 16
    %v112 = vadd.s32 %v111, %v109
    %vm113 = vcmp.lt.s32.totalorder %v75, 16
    %vm114 = vcmp.lt.s32.totalorder %v76, 16
    %v115 = vsel %vm113, %v98, 128
    %v116 = vsel %vm114, %v112, 128
    %vm117 = vcmp.eq.s32.totalorder %v68, %v115
    %vm118 = vcmp.eq.s32.totalorder %v68, %v116
    %119 = vset.pattern.permute.xlu0 0
    %120 = vperm.xlu0 %119, %v65
    %v121 = vpop.permute.xlu0 %120
    %122 = vset.pattern.permute.xlu0 0
    %123 = vperm.xlu0 %122, %v66
    %v124 = vpop.permute.xlu0 %123
    %vm125 = vcmp.eq.s32.totalorder %v68, %v121
    %vm126 = vcmp.eq.s32.totalorder %v68, %v124
    %vm127 = vmand %vm117, %vm125
    %vm128 = vmand %vm118, %vm126
    %v129 = vsel %vm127, 1, 0
    %v130 = vsel %vm128, 1, 0
    %v131 = vcvt.s32.f32 %v129
    %v132 = vcvt.s32.f32 %v130
    %v133 = vsel %vm117, 1, 0
    %v134 = vsel %vm118, 1, 0
    %v135 = vcvt.s32.f32 %v133
    %v136 = vcvt.s32.f32 %v134
    %v137 = vsel %vm125, 1, 0
    %v138 = vsel %vm126, 1, 0
    %v139 = vcvt.s32.f32 %v137
    %v140 = vcvt.s32.f32 %v138
    %v141 = vld [vmem:[#allocation2] sm:$0xff]
    %v142 = vadd.f32 %v131, %v132
    %v143 = vadd.f32 %v141, %v142
    %144 = vst [vmem:[#allocation2] sm:$0xff] %v143
    %s145 = scalar_lea.vmem [#allocation2], 8
    %v146 = vld [vmem:[%s145] sm:$0xff]
    %v147 = vadd.f32 %v135, %v136
    %v148 = vadd.f32 %v146, %v147
    %149 = vst [vmem:[%s145] sm:$0xff] %v148
    %s150 = scalar_lea.vmem [#allocation2], 16
    %v151 = vld [vmem:[%s150] sm:$0xff]
    %v152 = vadd.f32 %v139, %v140
    %v153 = vadd.f32 %v151, %v152
    %154 = vst [vmem:[%s150] sm:$0xff] %v153
    // Predicated region
    $region14: #{tpu_custom_call.1} parent=1 // pred_check
      _
    $region15: #{tpu_custom_call.1} parent=1 // pred_check_branch
      %156 = sbr.rel (0) target = $region17
    $region16: #{tpu_custom_call.1} parent=1 // pred_region
      %s158 = ssub.s32 384, 384
      %159 = vsyncadd [#allocation3], %s158
      %s160 = sshll.u32 [#allocation2], 4
      %s161 = int_to_ptr.vmem [resolvable:$true] %s160
      %166 = dma.vmem_to_hbm [thread:$0]  %s161, 384, %s2, [#allocation3], 128, 128, 8
    $region17: #{tpu_custom_call.1} parent=1 // pred_fallthru
      _
    // Predicated region
    $region18: #{tpu_custom_call.1} parent=1 // pred_check
      _
    $region19: #{tpu_custom_call.1} parent=1 // pred_check_branch
      %168 = sbr.rel (0) target = $region21
    $region20: #{tpu_custom_call.1} parent=1 // pred_region
      %169 = dma.done [#allocation3], 384
    $region21: #{tpu_custom_call.1} parent=1 // pred_fallthru
      _
    %170 = vsyncpa [#allocation3], 1

</llo_original>
